<compile_context>
chip_gen: v7x
topology: tpu7x:2x2x1
jax: 0.10.0
libtpu: 0.0.40
codegen_flags: <defaults>
</compile_context>

<pallas_src>
import functools

import jax
import jax.numpy as jnp
from jax.experimental import pallas as pl
from jax.experimental.pallas import tpu as pltpu

_NEG_BIG = jnp.float32(-1e30)   # masks padded vocab columns out of the LSE


def _round_up(a, b):
    return ((a + b - 1) // b) * b


# ---------------------------------------------------------------------------
# Pallas kernel: per-token log-prob of the label + per-token row-sum of logits
# ---------------------------------------------------------------------------
def _cpo_logps_kernel(x_ref, w_ref, b_ref, cmask_ref, lab_ref,   # inputs
                      logp_ref, rowsum_ref,                      # outputs (= accumulators)
                      m_sc, l_sc):                               # scratch (online LSE)
    j = pl.program_id(1)
    nv = pl.num_programs(1)

    @pl.when(j == 0)
    def _():
        m_sc[...] = jnp.full_like(m_sc, -jnp.inf)
        l_sc[...] = jnp.zeros_like(l_sc)
        logp_ref[...] = jnp.zeros_like(logp_ref)
        rowsum_ref[...] = jnp.zeros_like(rowsum_ref)

    # Native-dtype (bf16-friendly) MXU matmul, f32 accumulation: (tm, tv).
    logits = jax.lax.dot_general(
        x_ref[...], w_ref[...], (((1,), (1,)), ((), ())),
        preferred_element_type=jnp.float32)
    # Padded vocab columns carry a huge negative bias -> they never win the
    # running max and their exp underflows to exactly 0 in the LSE.
    logits = logits + b_ref[...].astype(jnp.float32)

    tm, tv = logits.shape
    local_ids = jax.lax.broadcasted_iota(jnp.int32, (tm, tv), 1)

    # Label match against j-shifted labels (ignore_index=-100 never matches).
    match = local_ids == (lab_ref[...] - j * tv)

    cmask = cmask_ref[...]                                  # (tv, 1) f32, 1=real col

    # Label-logit gather on the MXU (keeps the XLU free for the softmax).
    logp_ref[...] += jax.lax.dot_general(
        jnp.where(match, logits, 0.0), cmask,
        (((1,), (0,)), ((), ())), preferred_element_type=jnp.float32)

    # Row sum of real-column logits for the logits-mean metric, also on MXU.
    # (padded columns: huge-but-finite logit * 0.0 mask = exactly 0)
    rowsum_ref[...] += jax.lax.dot_general(
        logits, cmask, (((1,), (0,)), ((), ())),
        preferred_element_type=jnp.float32)

    # Online logsumexp over the vocab axis (padding already masked via bias).
    m_prev = m_sc[...]
    m_new = jnp.maximum(m_prev, jnp.max(logits, axis=-1, keepdims=True))
    l_sc[...] = (l_sc[...] * jnp.exp(m_prev - m_new)
                 + jnp.sum(jnp.exp(logits - m_new), axis=-1, keepdims=True))
    m_sc[...] = m_new

    @pl.when(j == nv - 1)
    def _():
        lse = m_sc[...] + jnp.log(l_sc[...])
        logp_ref[...] = logp_ref[...] - lse          # gathered log_softmax


def _cpo_logps(x2d, labels1d, weight, bias, *, tm=None, tv=None):
    """x2d: (N, H), labels1d: (N,) int32, weight: (V, H), bias: (V,).

    Returns (per_token_logp (N,), row_sum_logits (N,)) in float32.
    Handles arbitrary N / V via padding + masking."""
    N, H = x2d.shape
    V = weight.shape[0]
    itemsize = jnp.dtype(x2d.dtype).itemsize
    w_itemsize = jnp.dtype(weight.dtype).itemsize

    # Large tiles: big token tile -> the weight matrix is streamed from HBM
    # few times; big vocab tile -> fills the 256-wide MXU / amortizes per-step
    # overhead.  (tm collapses to the padded N for tiny problems.)
    if tm is None:
        tm = min(256, _round_up(N, 8))
    if tv is None:
        tv = min(512, _round_up(V, 128))

    def vmem_estimate(tm_, tv_):
        # double-buffered x / weight / bias / colmask tiles + f32 logits + acc.
        return (2 * (tm_ * H * itemsize + tv_ * H * w_itemsize)
                + 4 * tv_ * 4 + 2 * tm_ * tv_ * 4 + 16 * tm_ * 4)

    budget = 44 * 1024 * 1024           # comfortably inside v7x's 64 MiB / TC
    while vmem_estimate(tm, tv) > budget and tv > 128:
        tv //= 2
    while vmem_estimate(tm, tv) > budget and tm > 32:
        tm //= 2

    N_pad = _round_up(N, tm)
    V_pad = _round_up(V, tv)

    if N_pad != N:
        x2d = jnp.pad(x2d, ((0, N_pad - N), (0, 0)))
        labels1d = jnp.pad(labels1d, (0, N_pad - N), constant_values=-100)

    bias_f32 = bias.astype(jnp.float32)
    if V_pad != V:
        weight = jnp.pad(weight, ((0, V_pad - V), (0, 0)))
        bias_f32 = jnp.pad(bias_f32, (0, V_pad - V), constant_values=_NEG_BIG)

    labels2d = labels1d.reshape(N_pad, 1).astype(jnp.int32)
    bias2d = bias_f32.reshape(1, V_pad)
    colmask = (jnp.arange(V_pad, dtype=jnp.int32) < V).astype(
        jnp.float32).reshape(V_pad, 1)

    grid = (N_pad // tm, V_pad // tv)

    grid_spec = pltpu.PrefetchScalarGridSpec(
        num_scalar_prefetch=0,
        grid=grid,
        in_specs=[
            pl.BlockSpec((tm, H), lambda i, j: (i, 0)),   # x: resident over vocab loop
            pl.BlockSpec((tv, H), lambda i, j: (j, 0)),   # weight slab (streamed)
            pl.BlockSpec((1, tv), lambda i, j: (0, j)),   # bias slab
            pl.BlockSpec((tv, 1), lambda i, j: (j, 0)),   # vocab column mask
            pl.BlockSpec((tm, 1), lambda i, j: (i, 0)),   # labels
        ],
        out_specs=[
            pl.BlockSpec((tm, 1), lambda i, j: (i, 0)),   # per-token label logp
            pl.BlockSpec((tm, 1), lambda i, j: (i, 0)),   # per-token logits row sum
        ],
        scratch_shapes=[pltpu.VMEM((tm, 1), jnp.float32),   # running max
                        pltpu.VMEM((tm, 1), jnp.float32)],  # running sum(exp)
    )

    cost = pl.CostEstimate(
        flops=2 * N_pad * V_pad * H + 6 * N_pad * V_pad,
        transcendentals=N_pad * V_pad,
        bytes_accessed=int(grid[0] * V_pad * H * w_itemsize   # weight streamed N/tm times
                           + N_pad * H * itemsize + 8 * N_pad))

    vmem_limit = int(min(48 * 1024 * 1024,
                         max(32 * 1024 * 1024, 3 * vmem_estimate(tm, tv))))

    logp, rowsum = pl.pallas_call(
        _cpo_logps_kernel,
        grid_spec=grid_spec,
        out_shape=(jax.ShapeDtypeStruct((N_pad, 1), jnp.float32),
                   jax.ShapeDtypeStruct((N_pad, 1), jnp.float32)),
        compiler_params=pltpu.CompilerParams(
            dimension_semantics=("parallel", "arbitrary"),
            vmem_limit_bytes=vmem_limit),
        cost_estimate=cost,
    )(x2d, weight, bias2d, colmask, labels2d)
    return logp[:N, 0], rowsum[:N, 0]


# ---------------------------------------------------------------------------
# Wrapper reproducing TorchLMHeadCPO.forward (get_batch_loss_metrics)
# ---------------------------------------------------------------------------
@functools.partial(jax.jit, static_argnames=(
    "ignore_index", "beta", "alpha", "label_smoothing", "loss_type",
    "simpo_gamma"))
def lm_head_cpo_forward(x, y, weight, bias, *, ignore_index=-100, beta=0.1,
                        alpha=1.0, label_smoothing=0.0, loss_type="sigmoid",
                        simpo_gamma=0.5):
    B2, T, H = x.shape
    B = B2 // 2
    V = weight.shape[0]
    average_log_prob = (loss_type == "simpo")

    per_token_logp, row_sum = _cpo_logps(
        x.reshape(B2 * T, H), y.reshape(B2 * T), weight, bias)
    per_token_logp = per_token_logp.reshape(B2, T)
    row_sum = row_sum.reshape(B2, T)

    loss_mask = (y != ignore_index)
    masked_logp = jnp.where(loss_mask, per_token_logp, 0.0)
    if average_log_prob:
        all_logps = masked_logp.sum(-1) / loss_mask.sum(-1)
    else:
        all_logps = masked_logp.sum(-1)

    chosen_logps = all_logps[:B]
    rejected_logps = all_logps[B:]

    # NLL (cross-entropy mean over non-ignored tokens) on the chosen half.
    chosen_mask = loss_mask[:B]
    chosen_nll_loss = -jnp.sum(jnp.where(chosen_mask, per_token_logp[:B], 0.0)
                               ) / chosen_mask.sum()

    chosen_logits_mean = row_sum[:B].sum() / (B * T * V)
    rejected_logits_mean = row_sum[B:].sum() / (B * T * V)

    # HFCPOLoss.alignment_loss
    d = chosen_logps - rejected_logps
    if loss_type == "simpo":
        d = d - simpo_gamma / beta
    losses = (-jax.nn.log_sigmoid(beta * d) * (1.0 - label_smoothing)
              - jax.nn.log_sigmoid(-beta * d) * label_smoothing)
    chosen_rewards = beta * chosen_logps
    rejected_rewards = beta * rejected_logps

    loss = chosen_nll_loss * alpha - losses.mean()
    return loss, (chosen_logps, rejected_logps, chosen_logits_mean,
                  rejected_logits_mean, chosen_nll_loss,
                  chosen_rewards, rejected_rewards)


# ---------------------------------------------------------------------------
# Pure-JAX reference (same math, no Pallas) for a sanity check
# ---------------------------------------------------------------------------
def _reference(x, y, weight, bias, *, ignore_index=-100, beta=0.1, alpha=1.0,
               label_smoothing=0.0, loss_type="sigmoid", simpo_gamma=0.5):
    B2, T, H = x.shape
    B = B2 // 2
    V = weight.shape[0]
    logits = (x.astype(jnp.float32) @ weight.astype(jnp.float32).T
              + bias.astype(jnp.float32))
    logp_all = jax.nn.log_softmax(logits, axis=-1)
    safe_y = jnp.where(y == ignore_index, 0, y)
    per_token = jnp.take_along_axis(logp_all, safe_y[..., None], axis=-1)[..., 0]
    mask = (y != ignore_index)
    if loss_type == "simpo":
        all_logps = (per_token * mask).sum(-1) / mask.sum(-1)
    else:
        all_logps = (per_token * mask).sum(-1)
    chosen_logps, rejected_logps = all_logps[:B], all_logps[B:]
    nll = -(per_token[:B] * mask[:B]).sum() / mask[:B].sum()
    chosen_logits_mean = logits[:B].sum() / (B * T * V)
    rejected_logits_mean = logits[B:].sum() / (B * T * V)
    d = chosen_logps - rejected_logps
    if loss_type == "simpo":
        d = d - simpo_gamma / beta
    losses = (-jax.nn.log_sigmoid(beta * d) * (1 - label_smoothing)
              - jax.nn.log_sigmoid(-beta * d) * label_smoothing)
    loss = nll * alpha - losses.mean()
    return loss, chosen_logps, rejected_logps, chosen_logits_mean, rejected_logits_mean


if __name__ == "__main__":
    # Small, deliberately tile-UNALIGNED shapes: N = 2B*T = 28 tokens, V = 250
    # (exercises both the token-row padding and the vocab-column masking).
    B, T, H, V = 2, 7, 32, 250
    key = jax.random.PRNGKey(0)
    kx, ky, kw, km = jax.random.split(key, 4)

    x = jax.random.normal(kx, (2 * B, T, H), dtype=jnp.float32)
    y = jax.random.randint(ky, (2 * B, T), 0, V, dtype=jnp.int32)
    ignore = jax.random.bernoulli(km, 0.2, (2 * B, T))
    ignore = ignore.at[:, 0].set(False)          # keep >=1 valid token per row
    y = jnp.where(ignore, -100, y)

    # deterministic "Linear(H, V, bias=False)" weight; bias kept as zeros
    weight = (jax.random.normal(kw, (V, H), dtype=jnp.float32)
              / jnp.sqrt(jnp.float32(H)))
    bias = jnp.zeros((V,), dtype=jnp.float32)

    loss, aux = lm_head_cpo_forward(x, y, weight, bias,
                                    beta=0.1, alpha=1.0,
                                    label_smoothing=0.0,
                                    loss_type="sigmoid", simpo_gamma=0.5)
    jax.block_until_ready(loss)
    jax.block_until_ready(aux)

    (ref_loss, ref_ch_logps, ref_rj_logps,
     ref_ch_lmean, ref_rj_lmean) = _reference(x, y, weight, bias)
    chosen_logps, rejected_logps, ch_lmean, rj_lmean = aux[0], aux[1], aux[2], aux[3]

    assert jnp.allclose(loss, ref_loss, rtol=2e-3, atol=2e-3), (loss, ref_loss)
    assert jnp.allclose(chosen_logps, ref_ch_logps, rtol=2e-3, atol=2e-3)
    assert jnp.allclose(rejected_logps, ref_rj_logps, rtol=2e-3, atol=2e-3)
    assert jnp.allclose(ch_lmean, ref_ch_lmean, rtol=2e-3, atol=2e-3)
    assert jnp.allclose(rj_lmean, ref_rj_lmean, rtol=2e-3, atol=2e-3)

    # Exercise the native-bf16 MXU path (the dtype the torch module is usually
    # instantiated with); just check it compiles, runs and stays finite.
    loss_bf16, _ = lm_head_cpo_forward(
        x.astype(jnp.bfloat16), y, weight.astype(jnp.bfloat16), bias)
    jax.block_until_ready(loss_bf16)
    assert bool(jnp.isfinite(loss_bf16))

    print("KERNEL_OK")
</pallas_src>

<mosaic_0001>
module attributes {stable_mosaic.version = 11 : i64} {
  func.func @_cpo_logps_kernel(%arg0: i32, %arg1: i32, %arg2: memref<32x32xf32, #tpu.memory_space<vmem>>, %arg3: memref<256x32xf32, #tpu.memory_space<vmem>>, %arg4: memref<1x256xf32, #tpu.memory_space<vmem>>, %arg5: memref<256x1xf32, #tpu.memory_space<vmem>>, %arg6: memref<32x1xi32, #tpu.memory_space<vmem>>, %arg7: memref<32x1xf32, #tpu.memory_space<vmem>>, %arg8: memref<32x1xf32, #tpu.memory_space<vmem>>, %arg9: memref<32x1xf32, #tpu.memory_space<vmem>>, %arg10: memref<32x1xf32, #tpu.memory_space<vmem>>) attributes {dimension_semantics = [#tpu.dimension_semantics<parallel>, #tpu.dimension_semantics<arbitrary>], iteration_bounds = array<i64: 1, 1>, scalar_prefetch = 0 : i64, scratch_operands = 2 : i64, tpu.core_type = #tpu.core_type<tc>, window_params = [{transform_indices = @transform_0, window_bounds = array<i64: 32, 32>}, {transform_indices = @transform_1, window_bounds = array<i64: 256, 32>}, {transform_indices = @transform_2, window_bounds = array<i64: 1, 256>}, {transform_indices = @transform_3, window_bounds = array<i64: 256, 1>}, {transform_indices = @transform_4, window_bounds = array<i64: 32, 1>}, {transform_indices = @transform_5, window_bounds = array<i64: 32, 1>}, {transform_indices = @transform_6, window_bounds = array<i64: 32, 1>}]} {
    %c0_i32 = arith.constant 0 : i32
    %0 = arith.cmpi eq, %arg1, %c0_i32 : i32
    %1 = arith.extui %0 : i1 to i32
    %c0_i32_0 = arith.constant 0 : i32
    %2 = arith.cmpi ne, %1, %c0_i32_0 : i32
    scf.if %2 {
      %cst_33 = arith.constant 0xFF800000 : f32
      %46 = vector.broadcast %cst_33 : f32 to vector<32x1xf32>
      %c0_34 = arith.constant 0 : index
      %c0_35 = arith.constant 0 : index
      %47 = vector.load %arg9[%c0_34, %c0_35] : memref<32x1xf32, #tpu.memory_space<vmem>>, vector<32x1xf32>
      tpu.vector_store %arg9[%c0_34, %c0_35], %46 {strides = array<i32>} : memref<32x1xf32, #tpu.memory_space<vmem>>, vector<32x1xf32>,
      %cst_36 = arith.constant 0.000000e+00 : f32
      %48 = vector.broadcast %cst_36 : f32 to vector<32x1xf32>
      %c0_37 = arith.constant 0 : index
      %c0_38 = arith.constant 0 : index
      %49 = vector.load %arg10[%c0_37, %c0_38] : memref<32x1xf32, #tpu.memory_space<vmem>>, vector<32x1xf32>
      tpu.vector_store %arg10[%c0_37, %c0_38], %48 {strides = array<i32>} : memref<32x1xf32, #tpu.memory_space<vmem>>, vector<32x1xf32>,
      %cst_39 = arith.constant 0.000000e+00 : f32
      %50 = vector.broadcast %cst_39 : f32 to vector<32x1xf32>
      %c0_40 = arith.constant 0 : index
      %c0_41 = arith.constant 0 : index
      %51 = vector.load %arg7[%c0_40, %c0_41] : memref<32x1xf32, #tpu.memory_space<vmem>>, vector<32x1xf32>
      tpu.vector_store %arg7[%c0_40, %c0_41], %50 {strides = array<i32>} : memref<32x1xf32, #tpu.memory_space<vmem>>, vector<32x1xf32>,
      %cst_42 = arith.constant 0.000000e+00 : f32
      %52 = vector.broadcast %cst_42 : f32 to vector<32x1xf32>
      %c0_43 = arith.constant 0 : index
      %c0_44 = arith.constant 0 : index
      %53 = vector.load %arg8[%c0_43, %c0_44] : memref<32x1xf32, #tpu.memory_space<vmem>>, vector<32x1xf32>
      tpu.vector_store %arg8[%c0_43, %c0_44], %52 {strides = array<i32>} : memref<32x1xf32, #tpu.memory_space<vmem>>, vector<32x1xf32>,
    } else {
    }
    %c0 = arith.constant 0 : index
    %c0_1 = arith.constant 0 : index
    %3 = vector.load %arg2[%c0, %c0_1] : memref<32x32xf32, #tpu.memory_space<vmem>>, vector<32x32xf32>
    %c0_2 = arith.constant 0 : index
    %c0_3 = arith.constant 0 : index
    %4 = vector.load %arg3[%c0_2, %c0_3] : memref<256x32xf32, #tpu.memory_space<vmem>>, vector<256x32xf32>
    %cst = arith.constant dense<0.000000e+00> : vector<32x256xf32>
    %5 = tpu.matmul %3, %4, %cst {dimension_numbers = #tpu.dot_dimension_numbers<[1], [1], [0], [0], [0, 0, 1, 0], [], []>} : vector<32x32xf32>, vector<256x32xf32>, vector<32x256xf32> -> vector<32x256xf32>
    %c0_4 = arith.constant 0 : index
    %c0_5 = arith.constant 0 : index
    %6 = vector.load %arg4[%c0_4, %c0_5] : memref<1x256xf32, #tpu.memory_space<vmem>>, vector<1x256xf32>
    %7 = vector.broadcast %6 : vector<1x256xf32> to vector<32x256xf32>
    %8 = arith.addf %5, %7 : vector<32x256xf32>
    %9 = tpu.iota {dimensions = array<i32: 1>} : vector<32x256xi32>
    %c0_6 = arith.constant 0 : index
    %c0_7 = arith.constant 0 : index
    %10 = vector.load %arg6[%c0_6, %c0_7] : memref<32x1xi32, #tpu.memory_space<vmem>>, vector<32x1xi32>
    %c256_i32 = arith.constant 256 : i32
    %11 = arith.muli %arg1, %c256_i32 : i32
    %12 = vector.broadcast %11 : i32 to vector<32x1xi32>
    %13 = arith.subi %10, %12 : vector<32x1xi32>
    %14 = vector.broadcast %13 : vector<32x1xi32> to vector<32x256xi32>
    %15 = arith.cmpi eq, %9, %14 : vector<32x256xi32>
    %c0_8 = arith.constant 0 : index
    %c0_9 = arith.constant 0 : index
    %16 = vector.load %arg5[%c0_8, %c0_9] : memref<256x1xf32, #tpu.memory_space<vmem>>, vector<256x1xf32>
    %c0_10 = arith.constant 0 : index
    %c0_11 = arith.constant 0 : index
    %17 = vector.load %arg7[%c0_10, %c0_11] : memref<32x1xf32, #tpu.memory_space<vmem>>, vector<32x1xf32>
    %cst_12 = arith.constant 0.000000e+00 : f32
    %18 = vector.broadcast %cst_12 : f32 to vector<32x256xf32>
    %19 = arith.select %15, %8, %18 : vector<32x256xi1>, vector<32x256xf32>
    %cst_13 = arith.constant dense<0.000000e+00> : vector<32x1xf32>
    %20 = tpu.matmul %19, %16, %cst_13 {dimension_numbers = #tpu.dot_dimension_numbers<[1], [0], [0], [1], [0, 0, 1, 1], [], []>} : vector<32x256xf32>, vector<256x1xf32>, vector<32x1xf32> -> vector<32x1xf32>
    %21 = arith.addf %17, %20 : vector<32x1xf32>
    %c0_14 = arith.constant 0 : index
    %c0_15 = arith.constant 0 : index
    %22 = vector.load %arg7[%c0_14, %c0_15] : memref<32x1xf32, #tpu.memory_space<vmem>>, vector<32x1xf32>
    tpu.vector_store %arg7[%c0_14, %c0_15], %21 {strides = array<i32>} : memref<32x1xf32, #tpu.memory_space<vmem>>, vector<32x1xf32>,
    %c0_16 = arith.constant 0 : index
    %c0_17 = arith.constant 0 : index
    %23 = vector.load %arg8[%c0_16, %c0_17] : memref<32x1xf32, #tpu.memory_space<vmem>>, vector<32x1xf32>
    %cst_18 = arith.constant dense<0.000000e+00> : vector<32x1xf32>
    %24 = tpu.matmul %8, %16, %cst_18 {dimension_numbers = #tpu.dot_dimension_numbers<[1], [0], [0], [1], [0, 0, 1, 1], [], []>} : vector<32x256xf32>, vector<256x1xf32>, vector<32x1xf32> -> vector<32x1xf32>
    %25 = arith.addf %23, %24 : vector<32x1xf32>
    %c0_19 = arith.constant 0 : index
    %c0_20 = arith.constant 0 : index
    %26 = vector.load %arg8[%c0_19, %c0_20] : memref<32x1xf32, #tpu.memory_space<vmem>>, vector<32x1xf32>
    tpu.vector_store %arg8[%c0_19, %c0_20], %25 {strides = array<i32>} : memref<32x1xf32, #tpu.memory_space<vmem>>, vector<32x1xf32>,
    %c0_21 = arith.constant 0 : index
    %c0_22 = arith.constant 0 : index
    %27 = vector.load %arg9[%c0_21, %c0_22] : memref<32x1xf32, #tpu.memory_space<vmem>>, vector<32x1xf32>
    %cst_23 = arith.constant dense<0xFF800000> : vector<32xf32>
    %28 = vector.multi_reduction <maximumf>, %8, %cst_23 [1] : vector<32x256xf32> to vector<32xf32>
    %29 = vector.shape_cast %28 : vector<32xf32> to vector<32x1xf32>
    %30 = arith.maximumf %27, %29 : vector<32x1xf32>
    %c0_24 = arith.constant 0 : index
    %c0_25 = arith.constant 0 : index
    %31 = vector.load %arg10[%c0_24, %c0_25] : memref<32x1xf32, #tpu.memory_space<vmem>>, vector<32x1xf32>
    %32 = arith.subf %27, %30 : vector<32x1xf32>
    %33 = math.exp %32 : vector<32x1xf32>
    %34 = arith.mulf %31, %33 : vector<32x1xf32>
    %35 = vector.broadcast %30 : vector<32x1xf32> to vector<32x256xf32>
    %36 = arith.subf %8, %35 : vector<32x256xf32>
    %37 = math.exp %36 : vector<32x256xf32>
    %cst_26 = arith.constant dense<0.000000e+00> : vector<32xf32>
    %38 = vector.multi_reduction <add>, %37, %cst_26 [1] : vector<32x256xf32> to vector<32xf32>
    %39 = vector.shape_cast %38 : vector<32xf32> to vector<32x1xf32>
    %40 = arith.addf %34, %39 : vector<32x1xf32>
    %c0_27 = arith.constant 0 : index
    %c0_28 = arith.constant 0 : index
    %41 = vector.load %arg10[%c0_27, %c0_28] : memref<32x1xf32, #tpu.memory_space<vmem>>, vector<32x1xf32>
    tpu.vector_store %arg10[%c0_27, %c0_28], %40 {strides = array<i32>} : memref<32x1xf32, #tpu.memory_space<vmem>>, vector<32x1xf32>,
    %c0_29 = arith.constant 0 : index
    %c0_30 = arith.constant 0 : index
    %42 = vector.load %arg9[%c0_29, %c0_30] : memref<32x1xf32, #tpu.memory_space<vmem>>, vector<32x1xf32>
    tpu.vector_store %arg9[%c0_29, %c0_30], %30 {strides = array<i32>} : memref<32x1xf32, #tpu.memory_space<vmem>>, vector<32x1xf32>,
    %c0_i32_31 = arith.constant 0 : i32
    %43 = arith.cmpi eq, %arg1, %c0_i32_31 : i32
    %44 = arith.extui %43 : i1 to i32
    %c0_i32_32 = arith.constant 0 : i32
    %45 = arith.cmpi ne, %44, %c0_i32_32 : i32
    scf.if %45 {
      %c0_33 = arith.constant 0 : index
      %c0_34 = arith.constant 0 : index
      %46 = vector.load %arg9[%c0_33, %c0_34] : memref<32x1xf32, #tpu.memory_space<vmem>>, vector<32x1xf32>
      %c0_35 = arith.constant 0 : index
      %c0_36 = arith.constant 0 : index
      %47 = vector.load %arg10[%c0_35, %c0_36] : memref<32x1xf32, #tpu.memory_space<vmem>>, vector<32x1xf32>
      %48 = math.log %47 : vector<32x1xf32>
      %49 = arith.addf %46, %48 : vector<32x1xf32>
      %c0_37 = arith.constant 0 : index
      %c0_38 = arith.constant 0 : index
      %50 = vector.load %arg7[%c0_37, %c0_38] : memref<32x1xf32, #tpu.memory_space<vmem>>, vector<32x1xf32>
      %51 = arith.subf %50, %49 : vector<32x1xf32>
      %c0_39 = arith.constant 0 : index
      %c0_40 = arith.constant 0 : index
      %52 = vector.load %arg7[%c0_39, %c0_40] : memref<32x1xf32, #tpu.memory_space<vmem>>, vector<32x1xf32>
      tpu.vector_store %arg7[%c0_39, %c0_40], %51 {strides = array<i32>} : memref<32x1xf32, #tpu.memory_space<vmem>>, vector<32x1xf32>,
    } else {
    }
    return
  }
  func.func @transform_0(%arg0: i32, %arg1: i32) -> (i32, i32) {
    %c0_i32 = arith.constant 0 : i32
    %c0_i32_0 = arith.constant 0 : i32
    return %arg0, %c0_i32 : i32, i32
  }
  func.func @transform_1(%arg0: i32, %arg1: i32) -> (i32, i32) {
    %c0_i32 = arith.constant 0 : i32
    %c0_i32_0 = arith.constant 0 : i32
    return %arg1, %c0_i32 : i32, i32
  }
  func.func @transform_2(%arg0: i32, %arg1: i32) -> (i32, i32) {
    %c0_i32 = arith.constant 0 : i32
    %c0_i32_0 = arith.constant 0 : i32
    return %c0_i32, %arg1 : i32, i32
  }
  func.func @transform_3(%arg0: i32, %arg1: i32) -> (i32, i32) {
    %c0_i32 = arith.constant 0 : i32
    %c0_i32_0 = arith.constant 0 : i32
    return %arg1, %c0_i32 : i32, i32
  }
  func.func @transform_4(%arg0: i32, %arg1: i32) -> (i32, i32) {
    %c0_i32 = arith.constant 0 : i32
    %c0_i32_0 = arith.constant 0 : i32
    return %arg0, %c0_i32 : i32, i32
  }
  func.func @transform_5(%arg0: i32, %arg1: i32) -> (i32, i32) {
    %c0_i32 = arith.constant 0 : i32
    %c0_i32_0 = arith.constant 0 : i32
    return %arg0, %c0_i32 : i32, i32
  }
  func.func @transform_6(%arg0: i32, %arg1: i32) -> (i32, i32) {
    %c0_i32 = arith.constant 0 : i32
    %c0_i32_0 = arith.constant 0 : i32
    return %arg0, %c0_i32 : i32, i32
  }
}

</mosaic_0001>

<llo_original>
// kernel: squeeze.3
$region0: #{squeeze.3}
  %s0 = inlined_call_operand.vmem [shape: f32[28], index: 0, kind: input, shape index: {}]
  %s1 = inlined_call_operand.vmem [shape: f32[4,7], index: 1, kind: output, shape index: {}]
  $region1: #{squeeze.3} parent=0
    #allocation0 [shape = 'u8[4096]{0}', space=vmem, size = 0x1000, scoped, tag = 'scoped mem for output reshape']
    #allocation1 [shape = 'u8[4096]{0}', space=vmem, size = 0x1000, scoped, tag = 'scoped mem for input reshape']
    %s3 = sshllo.u32 0, 1
    %v4 = vld [vmem:[%s0] sm:%s3]
    %5 = vst [vmem:[#allocation1] sm:%s3] %v4
    %v6 = vld [vmem:[#allocation1] sm:$0x1]
    %vm7 = vcmask 56320
    %8 = vst.msk [vmem:[#allocation0] sm:$0x1] %vm7, %v6
    %v9 = vld [vmem:[#allocation1] sm:$0x1]
    %10 = vrot.lane.b32.xlu0 %v9, 121
    %v11 = vpop.permute.xlu0 %10
    %vm12 = vcmask 56320
    %s13 = scalar_lea.vmem [#allocation0], 1
    %14 = vst.msk [vmem:[%s13] sm:$0x1] %vm12, %v11
    %v15 = vld [vmem:[#allocation1] sm:$0x1]
    %16 = vrot.lane.b32.xlu0 %v15, 114
    %v17 = vpop.permute.xlu0 %16
    %vm18 = vcmask 56320
    %s19 = scalar_lea.vmem [#allocation0], 2
    %20 = vst.msk [vmem:[%s19] sm:$0x1] %vm18, %v17
    %v21 = vld [vmem:[#allocation1] sm:$0x1]
    %22 = vrot.lane.b32.xlu0 %v21, 107
    %v23 = vpop.permute.xlu0 %22
    %vm24 = vcmask 56320
    %s25 = scalar_lea.vmem [#allocation0], 3
    %26 = vst.msk [vmem:[%s25] sm:$0x1] %vm24, %v23
    %s28 = sshllo.u32 0, 4
    %v30 = vld [vmem:[#allocation0] sm:%s28]
    %s31 = sshllo.u32 0, 4
    %32 = vst [vmem:[%s1] sm:%s31] %v30

// kernel: lm_head_cpo_forward.1
$region0: #{lm_head_cpo_forward.1}
  #allocation0 [shape = 'u32[]', space=smem, size = 0x4, offset = 0x4, fixed_abs, tag = 'smem constant byte address 0x4 - core index']
  #allocation1 [shape = 'u32[144,128]{1,0:T(1,128)}', space=vmem, size = 0x12000, scoped, tag = 'internal scratch']
  #allocation2 [shape = 'f32[32,1]{1,0:T(8,128)}', space=vmem, size = 0x4000, scoped, tag = 'scratch operand']
  #allocation3 [shape = 'f32[32,1]{1,0:T(8,128)}', space=vmem, size = 0x4000, scoped, tag = 'scratch operand']
  %s0 = inlined_call_operand.vmem [shape: f32[32,32], index: 0, kind: input, shape index: {}]
  %s1 = inlined_call_operand.vmem [shape: f32[256,32], index: 1, kind: input, shape index: {}]
  %s2 = inlined_call_operand.vmem [shape: f32[1,256], index: 2, kind: input, shape index: {}]
  %s3 = inlined_call_operand.vmem [shape: f32[256,1], index: 3, kind: input, shape index: {}]
  %s4 = inlined_call_operand.vmem [shape: s32[32,1], index: 4, kind: input, shape index: {}]
  %s5 = inlined_call_operand.vmem [shape: f32[32,1], index: 5, kind: output, shape index: {0}]
  %s6 = inlined_call_operand.vmem [shape: f32[32,1], index: 6, kind: output, shape index: {1}]
  %7 = xla_tuple %s5, %s6
  %s8 = sld [smem:[#allocation0]]
  $region46: #{lm_head_cpo_forward.1} parent=0
    _
  %s10 = ssub.s32 1, %s8
  %s11 = scalar_select 0, %s10, %s8
  // Predicated region
  $region2: #{lm_head_cpo_forward.1} parent=0 // pred_check
    _
  $region3: #{lm_head_cpo_forward.1} parent=0 // pred_check_branch
    %13 = sbr.rel (0) target = $region5
  $region4: #{lm_head_cpo_forward.1} parent=0 // pred_region
    _
  $region5: #{lm_head_cpo_forward.1} parent=0 // pred_fallthru
    _
  // Predicated region
  $region6: #{lm_head_cpo_forward.1} parent=0 // pred_check
    _
  $region7: #{lm_head_cpo_forward.1} parent=0 // pred_check_branch
    %15 = sbr.rel (0) target = $region9
  $region8: #{lm_head_cpo_forward.1} parent=0 // pred_region
    _
  $region9: #{lm_head_cpo_forward.1} parent=0 // pred_fallthru
    _
  // Predicated region
  $region10: #{lm_head_cpo_forward.1} parent=0 // pred_check
    _
  $region11: #{lm_head_cpo_forward.1} parent=0 // pred_check_branch
    %17 = sbr.rel (0) target = $region13
  $region12: #{lm_head_cpo_forward.1} parent=0 // pred_region
    _
  $region13: #{lm_head_cpo_forward.1} parent=0 // pred_fallthru
    _
  // Predicated region
  $region14: #{lm_head_cpo_forward.1} parent=0 // pred_check
    _
  $region15: #{lm_head_cpo_forward.1} parent=0 // pred_check_branch
    %19 = sbr.rel (0) target = $region17
  $region16: #{lm_head_cpo_forward.1} parent=0 // pred_region
    _
  $region17: #{lm_head_cpo_forward.1} parent=0 // pred_fallthru
    _
  // Predicated region
  $region18: #{lm_head_cpo_forward.1} parent=0 // pred_check
    _
  $region19: #{lm_head_cpo_forward.1} parent=0 // pred_check_branch
    %21 = sbr.rel (0) target = $region21
  $region20: #{lm_head_cpo_forward.1} parent=0 // pred_region
    _
  $region21: #{lm_head_cpo_forward.1} parent=0 // pred_fallthru
    _
  %p22 = scmp.eq.s32.totalorder 0, 0
  // Predicated region
  $region22: #{lm_head_cpo_forward.1} parent=0 // pred_check
    %p23 = pneg %p22
  $region23: #{lm_head_cpo_forward.1} parent=0 // pred_check_branch
    %25 = sbr.rel (%p23) target = $region25
  $region24: #{lm_head_cpo_forward.1} parent=0 // pred_region
    %vm26 = vcmask 7168
    %27 = vst.msk [vmem:[#allocation2] sm:$0xff] %vm26, -inf
    %28 = vst.msk [vmem:[#allocation2 + $0x8] sm:$0xff] %vm26, -inf
    %29 = vst.msk [vmem:[#allocation2 + $0x10] sm:$0xff] %vm26, -inf
    %30 = vst.msk [vmem:[#allocation2 + $0x18] sm:$0xff] %vm26, -inf
    %31 = vst.msk [vmem:[#allocation3] sm:$0xff] %vm26, 0.0
    %32 = vst.msk [vmem:[#allocation3 + $0x8] sm:$0xff] %vm26, 0.0
    %33 = vst.msk [vmem:[#allocation3 + $0x10] sm:$0xff] %vm26, 0.0
    %34 = vst.msk [vmem:[#allocation3 + $0x18] sm:$0xff] %vm26, 0.0
    %35 = vst.msk [vmem:[%s5] sm:$0xff] %vm26, 0.0
    %36 = vst.msk [vmem:[%s5 + $0x8] sm:$0xff] %vm26, 0.0
    %37 = vst.msk [vmem:[%s5 + $0x10] sm:$0xff] %vm26, 0.0
    %38 = vst.msk [vmem:[%s5 + $0x18] sm:$0xff] %vm26, 0.0
    %39 = vst.msk [vmem:[%s6] sm:$0xff] %vm26, 0.0
    %40 = vst.msk [vmem:[%s6 + $0x8] sm:$0xff] %vm26, 0.0
    %41 = vst.msk [vmem:[%s6 + $0x10] sm:$0xff] %vm26, 0.0
    %42 = vst.msk [vmem:[%s6 + $0x18] sm:$0xff] %vm26, 0.0
  $region25: #{lm_head_cpo_forward.1} parent=0 // pred_fallthru
    _
  %v43 = vld [vmem:[%s0] sm:$0xff]
  %v44 = vld [vmem:[%s0 + $0x8] sm:$0xff]
  %v45 = vld [vmem:[%s0 + $0x10] sm:$0xff]
  %v46 = vld [vmem:[%s0 + $0x18] sm:$0xff]
  %v47 = vld [vmem:[%s1] sm:$0xff]
  %v48 = vld [vmem:[%s1 + $0x8] sm:$0xff]
  %v49 = vld [vmem:[%s1 + $0x10] sm:$0xff]
  %v50 = vld [vmem:[%s1 + $0x18] sm:$0xff]
  %v51 = vld [vmem:[%s1 + $0x20] sm:$0xff]
  %v52 = vld [vmem:[%s1 + $0x28] sm:$0xff]
  %v53 = vld [vmem:[%s1 + $0x30] sm:$0xff]
  %v54 = vld [vmem:[%s1 + $0x38] sm:$0xff]
  %v55 = vld [vmem:[%s1 + $0x40] sm:$0xff]
  %v56 = vld [vmem:[%s1 + $0x48] sm:$0xff]
  %v57 = vld [vmem:[%s1 + $0x50] sm:$0xff]
  %v58 = vld [vmem:[%s1 + $0x58] sm:$0xff]
  %v59 = vld [vmem:[%s1 + $0x60] sm:$0xff]
  %v60 = vld [vmem:[%s1 + $0x68] sm:$0xff]
  %v61 = vld [vmem:[%s1 + $0x70] sm:$0xff]
  %v62 = vld [vmem:[%s1 + $0x78] sm:$0xff]
  %v63 = vld [vmem:[%s1 + $0x80] sm:$0xff]
  %v64 = vld [vmem:[%s1 + $0x88] sm:$0xff]
  %v65 = vld [vmem:[%s1 + $0x90] sm:$0xff]
  %v66 = vld [vmem:[%s1 + $0x98] sm:$0xff]
  %v67 = vld [vmem:[%s1 + $0xa0] sm:$0xff]
  %v68 = vld [vmem:[%s1 + $0xa8] sm:$0xff]
  %v69 = vld [vmem:[%s1 + $0xb0] sm:$0xff]
  %v70 = vld [vmem:[%s1 + $0xb8] sm:$0xff]
  %v71 = vld [vmem:[%s1 + $0xc0] sm:$0xff]
  %v72 = vld [vmem:[%s1 + $0xc8] sm:$0xff]
  %v73 = vld [vmem:[%s1 + $0xd0] sm:$0xff]
  %v74 = vld [vmem:[%s1 + $0xd8] sm:$0xff]
  %v75 = vld [vmem:[%s1 + $0xe0] sm:$0xff]
  %v76 = vld [vmem:[%s1 + $0xe8] sm:$0xff]
  %v77 = vld [vmem:[%s1 + $0xf0] sm:$0xff]
  %v78 = vld [vmem:[%s1 + $0xf8] sm:$0xff]
  %v79 = vld [vmem:[%s2] sm:$0x3]
  %v81 = vlaneseq
  %v82 = vshrl.u32 %v81, 7
  %v83 = vsub.s32 0, %v82
  %v84 = vrot.slane %v79, %v83
  %v85 = vlaneseq
  %v86 = vshrl.u32 %v85, 7
  %v87 = vsub.s32 1, %v86
  %v88 = vrot.slane %v79, %v87
  %vm91 = vcmask 261120
  %v93 = vsel %vm91, %v43, 0
  %v96 = vsel %vm91, %v44, 0
  %v99 = vsel %vm91, %v45, 0
  %v102 = vsel %vm91, %v46, 0
  %v105 = vsel %vm91, %v47, 0
  %v108 = vsel %vm91, %v48, 0
  %v111 = vsel %vm91, %v49, 0
  %v114 = vsel %vm91, %v50, 0
  %v117 = vsel %vm91, %v51, 0
  %v120 = vsel %vm91, %v52, 0
  %v123 = vsel %vm91, %v53, 0
  %v126 = vsel %vm91, %v54, 0
  %v129 = vsel %vm91, %v55, 0
  %v132 = vsel %vm91, %v56, 0
  %v135 = vsel %vm91, %v57, 0
  %v138 = vsel %vm91, %v58, 0
  %v141 = vsel %vm91, %v59, 0
  %v144 = vsel %vm91, %v60, 0
  %v147 = vsel %vm91, %v61, 0
  %v150 = vsel %vm91, %v62, 0
  %v153 = vsel %vm91, %v63, 0
  %v156 = vsel %vm91, %v64, 0
  %v159 = vsel %vm91, %v65, 0
  %v162 = vsel %vm91, %v66, 0
  %v165 = vsel %vm91, %v67, 0
  %v168 = vsel %vm91, %v68, 0
  %v171 = vsel %vm91, %v69, 0
  %v174 = vsel %vm91, %v70, 0
  %v177 = vsel %vm91, %v71, 0
  %v180 = vsel %vm91, %v72, 0
  %v183 = vsel %vm91, %v73, 0
  %v186 = vsel %vm91, %v74, 0
  %v189 = vsel %vm91, %v75, 0
  %v192 = vsel %vm91, %v76, 0
  %v195 = vsel %vm91, %v77, 0
  %v198 = vsel %vm91, %v78, 0
  %200 = vmatprep.subr.mxu0 0.0
  %201 = vmatpush1.xpose.msra.mxu0 %v105
  %202 = vmatprep.subr.mxu0 0.0
  %203 = vmatpush1.xpose.msra.mxu0 %v108
  %204 = vmatprep.subr.mxu0 0.0
  %205 = vmatpush1.xpose.msra.mxu0 %v111
  %206 = vmatprep.subr.mxu0 0.0
  %207 = vmatpush1.xpose.msra.mxu0 %v114
  %208 = vmatprep.subr.mxu0 0.0
  %209 = vmatpush1.xpose.msra.mxu0 %v117
  %210 = vmatprep.subr.mxu0 0.0
  %211 = vmatpush1.xpose.msra.mxu0 %v120
  %212 = vmatprep.subr.mxu0 0.0
  %213 = vmatpush1.xpose.msra.mxu0 %v123
  %214 = vmatprep.subr.mxu0 0.0
  %215 = vmatpush1.xpose.msra.mxu0 %v126
  %216 = vmatprep.subr.mxu0 0.0
  %217 = vmatpush1.xpose.msra.mxu0 %v129
  %218 = vmatprep.subr.mxu0 0.0
  %219 = vmatpush1.xpose.msra.mxu0 %v132
  %220 = vmatprep.subr.mxu0 0.0
  %221 = vmatpush1.xpose.msra.mxu0 %v135
  %222 = vmatprep.subr.mxu0 0.0
  %223 = vmatpush1.xpose.msra.mxu0 %v138
  %224 = vmatprep.subr.mxu0 0.0
  %225 = vmatpush1.xpose.msra.mxu0 %v141
  %226 = vmatprep.subr.mxu0 0.0
  %227 = vmatpush1.xpose.msra.mxu0 %v144
  %228 = vmatprep.subr.mxu0 0.0
  %229 = vmatpush1.xpose.msra.mxu0 %v147
  %230 = vmatprep.subr.mxu0 0.0
  %231 = vmatpush1.xpose.msra.mxu0 %v150
  %232 = vmatprep.subr.mxu0 0.0
  %233 = vmatpush1.xpose.msra.mxu0 %v153
  %234 = vmatprep.subr.mxu0 0.0
  %235 = vmatpush1.xpose.msra.mxu0 %v156
  %236 = vmatprep.subr.mxu0 0.0
  %237 = vmatpush1.xpose.msra.mxu0 %v159
  %238 = vmatprep.subr.mxu0 0.0
  %239 = vmatpush1.xpose.msra.mxu0 %v162
  %240 = vmatprep.subr.mxu0 0.0
  %241 = vmatpush1.xpose.msra.mxu0 %v165
  %242 = vmatprep.subr.mxu0 0.0
  %243 = vmatpush1.xpose.msra.mxu0 %v168
  %244 = vmatprep.subr.mxu0 0.0
  %245 = vmatpush1.xpose.msra.mxu0 %v171
  %246 = vmatprep.subr.mxu0 0.0
  %247 = vmatpush1.xpose.msra.mxu0 %v174
  %248 = vmatprep.subr.mxu0 0.0
  %249 = vmatpush1.xpose.msra.mxu0 %v177
  %250 = vmatprep.subr.mxu0 0.0
  %251 = vmatpush1.xpose.msra.mxu0 %v180
  %252 = vmatprep.subr.mxu0 0.0
  %253 = vmatpush1.xpose.msra.mxu0 %v183
  %254 = vmatprep.subr.mxu0 0.0
  %255 = vmatpush1.xpose.msra.mxu0 %v186
  %256 = vmatprep.subr.mxu0 0.0
  %257 = vmatpush1.xpose.msra.mxu0 %v189
  %258 = vmatprep.subr.mxu0 0.0
  %259 = vmatpush1.xpose.msra.mxu0 %v192
  %260 = vmatprep.subr.mxu0 0.0
  %261 = vmatpush1.xpose.msra.mxu0 %v195
  %262 = vmatprep.subr.mxu0 0.0
  %263 = vmatpush1.xpose.msra.mxu0 %v198
  %264 = vmatprep.mubr.f32.mxu0 0.0
  %265 = vmatmul.mubr.f32.gmra.mrb[0].mxu0 %v93
  %v266 = vpop.f32.mrb[0].mxu0
  %v267 = vadd.f32 %v84, %v266
  %v268 = vpop.f32.mrb[0].mxu0
  %v269 = vadd.f32 %v88, %v268
  %270 = vmatprep.mubr.f32.mxu0 0.0
  %271 = vmatmul.mubr.f32.gmra.mrb[0].mxu0 %v96
  %v272 = vpop.f32.mrb[0].mxu0
  %v273 = vadd.f32 %v84, %v272
  %v274 = vpop.f32.mrb[0].mxu0
  %v275 = vadd.f32 %v88, %v274
  %276 = vmatprep.mubr.f32.mxu0 0.0
  %277 = vmatmul.mubr.f32.gmra.mrb[0].mxu0 %v99
  %v278 = vpop.f32.mrb[0].mxu0
  %v279 = vadd.f32 %v84, %v278
  %v280 = vpop.f32.mrb[0].mxu0
  %v281 = vadd.f32 %v88, %v280
  %282 = vmatprep.mubr.f32.mxu0 0.0
  %283 = vmatmul.mubr.f32.gmra.mrb[0].mxu0 %v102
  %v284 = vpop.f32.mrb[0].mxu0
  %v285 = vadd.f32 %v84, %v284
  %v286 = vpop.f32.mrb[0].mxu0
  %v287 = vadd.f32 %v88, %v286
  %288 = vdwg.mxu0
  %v289 = vlaneseq
  %v290 = vand.u32 %v289, 127
  %v291 = vadd.s32 %v290, 128
  %v292 = vld [vmem:[%s4] sm:$0xff]
  %v293 = vld [vmem:[%s4 + $0x8] sm:$0xff]
  %v294 = vld [vmem:[%s4 + $0x10] sm:$0xff]
  %v295 = vld [vmem:[%s4 + $0x18] sm:$0xff]
  %s296 = smul.u32 0, 256
  %v297 = vstv %s296
  %v298 = vsub.s32 %v292, %v297
  %v299 = vsub.s32 %v293, %v297
  %v300 = vsub.s32 %v294, %v297
  %v301 = vsub.s32 %v295, %v297
  %302 = vset.pattern.permute.xlu0 0
  %303 = vperm.xlu0 %302, %v298
  %v304 = vpop.permute.xlu0 %303
  %305 = vset.pattern.permute.xlu0 0
  %306 = vperm.xlu0 %305, %v299
  %v307 = vpop.permute.xlu0 %306
  %308 = vset.pattern.permute.xlu0 0
  %309 = vperm.xlu0 %308, %v300
  %v310 = vpop.permute.xlu0 %309
  %311 = vset.pattern.permute.xlu0 0
  %312 = vperm.xlu0 %311, %v301
  %v313 = vpop.permute.xlu0 %312
  %vm314 = vcmp.eq.s32.totalorder %v290, %v304
  %vm315 = vcmp.eq.s32.totalorder %v291, %v304
  %vm316 = vcmp.eq.s32.totalorder %v290, %v307
  %vm317 = vcmp.eq.s32.totalorder %v291, %v307
  %vm318 = vcmp.eq.s32.totalorder %v290, %v310
  %vm319 = vcmp.eq.s32.totalorder %v291, %v310
  %vm320 = vcmp.eq.s32.totalorder %v290, %v313
  %vm321 = vcmp.eq.s32.totalorder %v291, %v313
  %v322 = vld [vmem:[%s3] sm:$0xff]
  %v323 = vld [vmem:[%s3 + $0x8] sm:$0xff]
  %v324 = vld [vmem:[%s3 + $0x10] sm:$0xff]
  %v325 = vld [vmem:[%s3 + $0x18] sm:$0xff]
  %v326 = vld [vmem:[%s3 + $0x20] sm:$0xff]
  %v327 = vld [vmem:[%s3 + $0x28] sm:$0xff]
  %v328 = vld [vmem:[%s3 + $0x30] sm:$0xff]
  %v329 = vld [vmem:[%s3 + $0x38] sm:$0xff]
  %v330 = vld [vmem:[%s3 + $0x40] sm:$0xff]
  %v331 = vld [vmem:[%s3 + $0x48] sm:$0xff]
  %v332 = vld [vmem:[%s3 + $0x50] sm:$0xff]
  %v333 = vld [vmem:[%s3 + $0x58] sm:$0xff]
  %v334 = vld [vmem:[%s3 + $0x60] sm:$0xff]
  %v335 = vld [vmem:[%s3 + $0x68] sm:$0xff]
  %v336 = vld [vmem:[%s3 + $0x70] sm:$0xff]
  %v337 = vld [vmem:[%s3 + $0x78] sm:$0xff]
  %v338 = vld [vmem:[%s3 + $0x80] sm:$0xff]
  %v339 = vld [vmem:[%s3 + $0x88] sm:$0xff]
  %v340 = vld [vmem:[%s3 + $0x90] sm:$0xff]
  %v341 = vld [vmem:[%s3 + $0x98] sm:$0xff]
  %v342 = vld [vmem:[%s3 + $0xa0] sm:$0xff]
  %v343 = vld [vmem:[%s3 + $0xa8] sm:$0xff]
  %v344 = vld [vmem:[%s3 + $0xb0] sm:$0xff]
  %v345 = vld [vmem:[%s3 + $0xb8] sm:$0xff]
  %v346 = vld [vmem:[%s3 + $0xc0] sm:$0xff]
  %v347 = vld [vmem:[%s3 + $0xc8] sm:$0xff]
  %v348 = vld [vmem:[%s3 + $0xd0] sm:$0xff]
  %v349 = vld [vmem:[%s3 + $0xd8] sm:$0xff]
  %v350 = vld [vmem:[%s3 + $0xe0] sm:$0xff]
  %v351 = vld [vmem:[%s3 + $0xe8] sm:$0xff]
  %v352 = vld [vmem:[%s3 + $0xf0] sm:$0xff]
  %v353 = vld [vmem:[%s3 + $0xf8] sm:$0xff]
  %v354 = vld [vmem:[%s5] sm:$0xff]
  %v355 = vld [vmem:[%s5 + $0x8] sm:$0xff]
  %v356 = vld [vmem:[%s5 + $0x10] sm:$0xff]
  %v357 = vld [vmem:[%s5 + $0x18] sm:$0xff]
  %v358 = vsel %vm314, %v267, 0.0
  %v359 = vsel %vm315, %v269, 0.0
  %v360 = vsel %vm316, %v273, 0.0
  %v361 = vsel %vm317, %v275, 0.0
  %v362 = vsel %vm318, %v279, 0.0
  %v363 = vsel %vm319, %v281, 0.0
  %v364 = vsel %vm320, %v285, 0.0
  %v365 = vsel %vm321, %v287, 0.0
  %366 = vmatprep.subr.mxu0 0.0
  %367 = vmatpush1.msra.mxu0 %v322
  %368 = vmatprep.subr.mxu0 0.0
  %369 = vmatpush1.msra.mxu0 %v323
  %370 = vmatprep.subr.mxu0 0.0
  %371 = vmatpush1.msra.mxu0 %v324
  %372 = vmatprep.subr.mxu0 0.0
  %373 = vmatpush1.msra.mxu0 %v325
  %374 = vmatprep.subr.mxu0 0.0
  %375 = vmatpush1.msra.mxu0 %v326
  %376 = vmatprep.subr.mxu0 0.0
  %377 = vmatpush1.msra.mxu0 %v327
  %378 = vmatprep.subr.mxu0 0.0
  %379 = vmatpush1.msra.mxu0 %v328
  %380 = vmatprep.subr.mxu0 0.0
  %381 = vmatpush1.msra.mxu0 %v329
  %382 = vmatprep.subr.mxu0 0.0
  %383 = vmatpush1.msra.mxu0 %v330
  %384 = vmatprep.subr.mxu0 0.0
  %385 = vmatpush1.msra.mxu0 %v331
  %386 = vmatprep.subr.mxu0 0.0
  %387 = vmatpush1.msra.mxu0 %v332
  %388 = vmatprep.subr.mxu0 0.0
  %389 = vmatpush1.msra.mxu0 %v333
  %390 = vmatprep.subr.mxu0 0.0
  %391 = vmatpush1.msra.mxu0 %v334
  %392 = vmatprep.subr.mxu0 0.0
  %393 = vmatpush1.msra.mxu0 %v335
  %394 = vmatprep.subr.mxu0 0.0
  %395 = vmatpush1.msra.mxu0 %v336
  %396 = vmatprep.subr.mxu0 0.0
  %397 = vmatpush1.msra.mxu0 %v337
  %398 = vmatprep.subr.mxu0 0.0
  %399 = vmatpush1.msra.mxu0 %v338
  %400 = vmatprep.subr.mxu0 0.0
  %401 = vmatpush1.msra.mxu0 %v339
  %402 = vmatprep.subr.mxu0 0.0
  %403 = vmatpush1.msra.mxu0 %v340
  %404 = vmatprep.subr.mxu0 0.0
  %405 = vmatpush1.msra.mxu0 %v341
  %406 = vmatprep.subr.mxu0 0.0
  %407 = vmatpush1.msra.mxu0 %v342
  %408 = vmatprep.subr.mxu0 0.0
  %409 = vmatpush1.msra.mxu0 %v343
  %410 = vmatprep.subr.mxu0 0.0
  %411 = vmatpush1.msra.mxu0 %v344
  %412 = vmatprep.subr.mxu0 0.0
  %413 = vmatpush1.msra.mxu0 %v345
  %414 = vmatprep.subr.mxu0 0.0
  %415 = vmatpush1.msra.mxu0 %v346
  %416 = vmatprep.subr.mxu0 0.0
  %417 = vmatpush1.msra.mxu0 %v347
  %418 = vmatprep.subr.mxu0 0.0
  %419 = vmatpush1.msra.mxu0 %v348
  %420 = vmatprep.subr.mxu0 0.0
  %421 = vmatpush1.msra.mxu0 %v349
  %422 = vmatprep.subr.mxu0 0.0
  %423 = vmatpush1.msra.mxu0 %v350
  %424 = vmatprep.subr.mxu0 0.0
  %425 = vmatpush1.msra.mxu0 %v351
  %426 = vmatprep.subr.mxu0 0.0
  %427 = vmatpush1.msra.mxu0 %v352
  %428 = vmatprep.subr.mxu0 0.0
  %429 = vmatpush1.msra.mxu0 %v353
  %430 = vmatprep.mubr.f32.mxu0 %v359
  %431 = vmatmul.mubr.f32.gmra.mrb[0].mxu0 %v358
  %v432 = vpop.f32.mrb[0].mxu0
  %v433 = vadd.f32 0.0, %v432
  %v434 = vpop.f32.mrb[0].mxu0
  %435 = vmatprep.mubr.f32.mxu0 %v361
  %436 = vmatmul.mubr.f32.gmra.mrb[0].mxu0 %v360
  %v437 = vpop.f32.mrb[0].mxu0
  %v438 = vadd.f32 0.0, %v437
  %v439 = vpop.f32.mrb[0].mxu0
  %440 = vmatprep.mubr.f32.mxu0 %v363
  %441 = vmatmul.mubr.f32.gmra.mrb[0].mxu0 %v362
  %v442 = vpop.f32.mrb[0].mxu0
  %v443 = vadd.f32 0.0, %v442
  %v444 = vpop.f32.mrb[0].mxu0
  %445 = vmatprep.mubr.f32.mxu0 %v365
  %446 = vmatmul.mubr.f32.gmra.mrb[0].mxu0 %v364
  %v447 = vpop.f32.mrb[0].mxu0
  %v448 = vadd.f32 0.0, %v447
  %v449 = vpop.f32.mrb[0].mxu0
  %450 = vdwg.mxu0
  %v451 = vadd.f32 %v354, %v433
  %v452 = vadd.f32 %v355, %v438
  %v453 = vadd.f32 %v356, %v443
  %v454 = vadd.f32 %v357, %v448
  %vm455 = vcmask 7168
  %456 = vst.msk [vmem:[%s5] sm:$0xff] %vm455, %v451
  %457 = vst.msk [vmem:[%s5 + $0x8] sm:$0xff] %vm455, %v452
  %458 = vst.msk [vmem:[%s5 + $0x10] sm:$0xff] %vm455, %v453
  %459 = vst.msk [vmem:[%s5 + $0x18] sm:$0xff] %vm455, %v454
  %v460 = vld [vmem:[%s6] sm:$0xff]
  %v461 = vld [vmem:[%s6 + $0x8] sm:$0xff]
  %v462 = vld [vmem:[%s6 + $0x10] sm:$0xff]
  %v463 = vld [vmem:[%s6 + $0x18] sm:$0xff]
  %464 = vmatprep.subr.mxu0 0.0
  %465 = vmatpush1.msra.mxu0 %v322
  %466 = vmatprep.subr.mxu0 0.0
  %467 = vmatpush1.msra.mxu0 %v323
  %468 = vmatprep.subr.mxu0 0.0
  %469 = vmatpush1.msra.mxu0 %v324
  %470 = vmatprep.subr.mxu0 0.0
  %471 = vmatpush1.msra.mxu0 %v325
  %472 = vmatprep.subr.mxu0 0.0
  %473 = vmatpush1.msra.mxu0 %v326
  %474 = vmatprep.subr.mxu0 0.0
  %475 = vmatpush1.msra.mxu0 %v327
  %476 = vmatprep.subr.mxu0 0.0
  %477 = vmatpush1.msra.mxu0 %v328
  %478 = vmatprep.subr.mxu0 0.0
  %479 = vmatpush1.msra.mxu0 %v329
  %480 = vmatprep.subr.mxu0 0.0
  %481 = vmatpush1.msra.mxu0 %v330
  %482 = vmatprep.subr.mxu0 0.0
  %483 = vmatpush1.msra.mxu0 %v331
  %484 = vmatprep.subr.mxu0 0.0
  %485 = vmatpush1.msra.mxu0 %v332
  %486 = vmatprep.subr.mxu0 0.0
  %487 = vmatpush1.msra.mxu0 %v333
  %488 = vmatprep.subr.mxu0 0.0
  %489 = vmatpush1.msra.mxu0 %v334
  %490 = vmatprep.subr.mxu0 0.0
  %491 = vmatpush1.msra.mxu0 %v335
  %492 = vmatprep.subr.mxu0 0.0
  %493 = vmatpush1.msra.mxu0 %v336
  %494 = vmatprep.subr.mxu0 0.0
  %495 = vmatpush1.msra.mxu0 %v337
  %496 = vmatprep.subr.mxu0 0.0
  %497 = vmatpush1.msra.mxu0 %v338
  %498 = vmatprep.subr.mxu0 0.0
  %499 = vmatpush1.msra.mxu0 %v339
  %500 = vmatprep.subr.mxu0 0.0
  %501 = vmatpush1.msra.mxu0 %v340
  %502 = vmatprep.subr.mxu0 0.0
  %503 = vmatpush1.msra.mxu0 %v341
  %504 = vmatprep.subr.mxu0 0.0
  %505 = vmatpush1.msra.mxu0 %v342
  %506 = vmatprep.subr.mxu0 0.0
  %507 = vmatpush1.msra.mxu0 %v343
  %508 = vmatprep.subr.mxu0 0.0
  %509 = vmatpush1.msra.mxu0 %v344
  %510 = vmatprep.subr.mxu0 0.0
  %511 = vmatpush1.msra.mxu0 %v345
  %512 = vmatprep.subr.mxu0 0.0
  %513 = vmatpush1.msra.mxu0 %v346
  %514 = vmatprep.subr.mxu0 0.0
  %515 = vmatpush1.msra.mxu0 %v347
  %516 = vmatprep.subr.mxu0 0.0
  %517 = vmatpush1.msra.mxu0 %v348
  %518 = vmatprep.subr.mxu0 0.0
  %519 = vmatpush1.msra.mxu0 %v349
  %520 = vmatprep.subr.mxu0 0.0
  %521 = vmatpush1.msra.mxu0 %v350
  %522 = vmatprep.subr.mxu0 0.0
  %523 = vmatpush1.msra.mxu0 %v351
  %524 = vmatprep.subr.mxu0 0.0
  %525 = vmatpush1.msra.mxu0 %v352
  %526 = vmatprep.subr.mxu0 0.0
  %527 = vmatpush1.msra.mxu0 %v353
  %528 = vmatprep.mubr.f32.mxu0 %v269
  %529 = vmatmul.mubr.f32.gmra.mrb[0].mxu0 %v267
  %v530 = vpop.f32.mrb[0].mxu0
  %v531 = vadd.f32 0.0, %v530
  %v532 = vpop.f32.mrb[0].mxu0
  %533 = vmatprep.mubr.f32.mxu0 %v275
  %534 = vmatmul.mubr.f32.gmra.mrb[0].mxu0 %v273
  %v535 = vpop.f32.mrb[0].mxu0
  %v536 = vadd.f32 0.0, %v535
  %v537 = vpop.f32.mrb[0].mxu0
  %538 = vmatprep.mubr.f32.mxu0 %v281
  %539 = vmatmul.mubr.f32.gmra.mrb[0].mxu0 %v279
  %v540 = vpop.f32.mrb[0].mxu0
  %v541 = vadd.f32 0.0, %v540
  %v542 = vpop.f32.mrb[0].mxu0
  %543 = vmatprep.mubr.f32.mxu0 %v287
  %544 = vmatmul.mubr.f32.gmra.mrb[0].mxu0 %v285
  %v545 = vpop.f32.mrb[0].mxu0
  %v546 = vadd.f32 0.0, %v545
  %v547 = vpop.f32.mrb[0].mxu0
  %548 = vdwg.mxu0
  %v549 = vadd.f32 %v460, %v531
  %v550 = vadd.f32 %v461, %v536
  %v551 = vadd.f32 %v462, %v541
  %v552 = vadd.f32 %v463, %v546
  %553 = vst.msk [vmem:[%s6] sm:$0xff] %vm455, %v549
  %554 = vst.msk [vmem:[%s6 + $0x8] sm:$0xff] %vm455, %v550
  %555 = vst.msk [vmem:[%s6 + $0x10] sm:$0xff] %vm455, %v551
  %556 = vst.msk [vmem:[%s6 + $0x18] sm:$0xff] %vm455, %v552
  %v557 = vld [vmem:[#allocation2] sm:$0xff]
  %v558 = vld [vmem:[#allocation2 + $0x8] sm:$0xff]
  %v559 = vld [vmem:[#allocation2 + $0x10] sm:$0xff]
  %v560 = vld [vmem:[#allocation2 + $0x18] sm:$0xff]
  %v561 = vmax.f32 %v267, %v269
  %562 = vmax.xlane.f32.xlu0 %v561
  %v563 = vpop.xlane.xlu0 %562
  %v564 = vmax.f32 %v273, %v275
  %565 = vmax.xlane.f32.xlu0 %v564
  %v566 = vpop.xlane.xlu0 %565
  %v567 = vmax.f32 %v279, %v281
  %568 = vmax.xlane.f32.xlu0 %v567
  %v569 = vpop.xlane.xlu0 %568
  %v570 = vmax.f32 %v285, %v287
  %571 = vmax.xlane.f32.xlu0 %v570
  %v572 = vpop.xlane.xlu0 %571
  %v573 = vmax.f32 %v557, %v563
  %v574 = vmax.f32 %v558, %v566
  %v575 = vmax.f32 %v559, %v569
  %v576 = vmax.f32 %v560, %v572
  %v577 = vld [vmem:[#allocation3] sm:$0xff]
  %v578 = vld [vmem:[#allocation3 + $0x8] sm:$0xff]
  %v579 = vld [vmem:[#allocation3 + $0x10] sm:$0xff]
  %v580 = vld [vmem:[#allocation3 + $0x18] sm:$0xff]
  %v581 = vsub.f32 %v557, %v573
  %v582 = vsub.f32 %v558, %v574
  %v583 = vsub.f32 %v559, %v575
  %v584 = vsub.f32 %v560, %v576
  %v585 = vmul.f32 %v581, 1.442695
  %v586 = vpow.pop %v585
  %v587 = vmul.f32 %v582, 1.442695
  %v588 = vpow.pop %v587
  %v589 = vmul.f32 %v583, 1.442695
  %v590 = vpow.pop %v589
  %v591 = vmul.f32 %v584, 1.442695
  %v592 = vpow.pop %v591
  %v593 = vmul.f32 %v577, %v586
  %v594 = vmul.f32 %v578, %v588
  %v595 = vmul.f32 %v579, %v590
  %v596 = vmul.f32 %v580, %v592
  %598 = vset.pattern.permute.xlu0 0
  %599 = vperm.xlu0 %598, %v573
  %v600 = vpop.permute.xlu0 %599
  %603 = vset.pattern.permute.xlu0 0
  %604 = vperm.xlu0 %603, %v574
  %v605 = vpop.permute.xlu0 %604
  %608 = vset.pattern.permute.xlu0 0
  %609 = vperm.xlu0 %608, %v575
  %v610 = vpop.permute.xlu0 %609
  %613 = vset.pattern.permute.xlu0 0
  %614 = vperm.xlu0 %613, %v576
  %v615 = vpop.permute.xlu0 %614
  %v617 = vsub.f32 %v267, %v600
  %v618 = vsub.f32 %v269, %v600
  %v619 = vsub.f32 %v273, %v605
  %v620 = vsub.f32 %v275, %v605
  %v621 = vsub.f32 %v279, %v610
  %v622 = vsub.f32 %v281, %v610
  %v623 = vsub.f32 %v285, %v615
  %v624 = vsub.f32 %v287, %v615
  %v625 = vmul.f32 %v617, 1.442695
  %v626 = vpow.pop %v625
  %v627 = vmul.f32 %v618, 1.442695
  %v628 = vpow.pop %v627
  %v629 = vmul.f32 %v619, 1.442695
  %v630 = vpow.pop %v629
  %v631 = vmul.f32 %v620, 1.442695
  %v632 = vpow.pop %v631
  %v633 = vmul.f32 %v621, 1.442695
  %v634 = vpow.pop %v633
  %v635 = vmul.f32 %v622, 1.442695
  %v636 = vpow.pop %v635
  %v637 = vmul.f32 %v623, 1.442695
  %v638 = vpow.pop %v637
  %v639 = vmul.f32 %v624, 1.442695
  %v640 = vpow.pop %v639
  %v641 = vadd.f32 %v626, %v628
  %642 = vadd.xlane.f32.xlu0 %v641
  %v643 = vpop.xlane.xlu0 %642
  %v644 = vadd.f32 %v630, %v632
  %645 = vadd.xlane.f32.xlu0 %v644
  %v646 = vpop.xlane.xlu0 %645
  %v647 = vadd.f32 %v634, %v636
  %648 = vadd.xlane.f32.xlu0 %v647
  %v649 = vpop.xlane.xlu0 %648
  %v650 = vadd.f32 %v638, %v640
  %651 = vadd.xlane.f32.xlu0 %v650
  %v652 = vpop.xlane.xlu0 %651
  %v653 = vadd.f32 %v593, %v643
  %v654 = vadd.f32 %v594, %v646
  %v655 = vadd.f32 %v595, %v649
  %v656 = vadd.f32 %v596, %v652
  %657 = vst.msk [vmem:[#allocation3] sm:$0xff] %vm455, %v653
  %658 = vst.msk [vmem:[#allocation3 + $0x8] sm:$0xff] %vm455, %v654
  %659 = vst.msk [vmem:[#allocation3 + $0x10] sm:$0xff] %vm455, %v655
  %660 = vst.msk [vmem:[#allocation3 + $0x18] sm:$0xff] %vm455, %v656
  %661 = vst.msk [vmem:[#allocation2] sm:$0xff] %vm455, %v573
  %662 = vst.msk [vmem:[#allocation2 + $0x8] sm:$0xff] %vm455, %v574
  %663 = vst.msk [vmem:[#allocation2 + $0x10] sm:$0xff] %vm455, %v575
  %664 = vst.msk [vmem:[#allocation2 + $0x18] sm:$0xff] %vm455, %v576
  // Predicated region
  $region26: #{lm_head_cpo_forward.1} parent=0 // pred_check
    %p665 = pneg %p22
  $region27: #{lm_head_cpo_forward.1} parent=0 // pred_check_branch
    %667 = sbr.rel (%p665) target = $region29
  $region28: #{lm_head_cpo_forward.1} parent=0 // pred_region
    %v668 = vld [vmem:[#allocation2] sm:$0xff]
    %v669 = vld [vmem:[#allocation2 + $0x8] sm:$0xff]
    %v670 = vld [vmem:[#allocation2 + $0x10] sm:$0xff]
    %v671 = vld [vmem:[#allocation2 + $0x18] sm:$0xff]
    %v672 = vld [vmem:[#allocation3] sm:$0xff]
    %v673 = vld [vmem:[#allocation3 + $0x8] sm:$0xff]
    %v674 = vld [vmem:[#allocation3 + $0x10] sm:$0xff]
    %v675 = vld [vmem:[#allocation3 + $0x18] sm:$0xff]
    %v676 = vlog2.pop %v672
    %v677 = vmul.f32 %v676, 0.6931472
    %v678 = vlog2.pop %v673
    %v679 = vmul.f32 %v678, 0.6931472
    %v680 = vlog2.pop %v674
    %v681 = vmul.f32 %v680, 0.6931472
    %v682 = vlog2.pop %v675
    %v683 = vmul.f32 %v682, 0.6931472
    %v684 = vadd.f32 %v668, %v677
    %v685 = vadd.f32 %v669, %v679
    %v686 = vadd.f32 %v670, %v681
    %v687 = vadd.f32 %v671, %v683
    %v688 = vld [vmem:[%s5] sm:$0xff]
    %v689 = vld [vmem:[%s5 + $0x8] sm:$0xff]
    %v690 = vld [vmem:[%s5 + $0x10] sm:$0xff]
    %v691 = vld [vmem:[%s5 + $0x18] sm:$0xff]
    %v692 = vsub.f32 %v688, %v684
    %v693 = vsub.f32 %v689, %v685
    %v694 = vsub.f32 %v690, %v686
    %v695 = vsub.f32 %v691, %v687
    %696 = vst.msk [vmem:[%s5] sm:$0xff] %vm455, %v692
    %697 = vst.msk [vmem:[%s5 + $0x8] sm:$0xff] %vm455, %v693
    %698 = vst.msk [vmem:[%s5 + $0x10] sm:$0xff] %vm455, %v694
    %699 = vst.msk [vmem:[%s5 + $0x18] sm:$0xff] %vm455, %v695
  $region29: #{lm_head_cpo_forward.1} parent=0 // pred_fallthru
    _
  // Predicated region
  $region30: #{lm_head_cpo_forward.1} parent=0 // pred_check
    _
  $region31: #{lm_head_cpo_forward.1} parent=0 // pred_check_branch
    %701 = sbr.rel (0) target = $region33
  $region32: #{lm_head_cpo_forward.1} parent=0 // pred_region
    _
  $region33: #{lm_head_cpo_forward.1} parent=0 // pred_fallthru
    _
  // Predicated region
  $region34: #{lm_head_cpo_forward.1} parent=0 // pred_check
    _
  $region35: #{lm_head_cpo_forward.1} parent=0 // pred_check_branch
    %703 = sbr.rel (0) target = $region37
  $region36: #{lm_head_cpo_forward.1} parent=0 // pred_region
    _
  $region37: #{lm_head_cpo_forward.1} parent=0 // pred_fallthru
    _
  // Predicated region
  $region38: #{lm_head_cpo_forward.1} parent=0 // pred_check
    _
  $region39: #{lm_head_cpo_forward.1} parent=0 // pred_check_branch
    %705 = sbr.rel (0) target = $region41
  $region40: #{lm_head_cpo_forward.1} parent=0 // pred_region
    _
  $region41: #{lm_head_cpo_forward.1} parent=0 // pred_fallthru
    _
  // Predicated region
  $region42: #{lm_head_cpo_forward.1} parent=0 // pred_check
    _
  $region43: #{lm_head_cpo_forward.1} parent=0 // pred_check_branch
    %707 = sbr.rel (0) target = $region45
  $region44: #{lm_head_cpo_forward.1} parent=0 // pred_region
    _
  $region45: #{lm_head_cpo_forward.1} parent=0 // pred_fallthru
    _

</llo_original>
